<compile_context>
chip_gen: v6e
topology: v6e:2x2x1
jax: 0.10.0
libtpu: 0.0.40
codegen_flags: <defaults>
</compile_context>

<pallas_src>
import jax
import jax.numpy as jnp
from jax.experimental import pallas as pl
from jax.experimental.pallas import tpu as pltpu

d_model = 128
d_ff = 512
_LN_EPS = 1e-5


def _round_up(x, m):
    return (x + m - 1) // m * m


def ffn_kernel(x_ref, w1_ref, w2_ref, out_ref):
    """One row tile: out = LayerNorm(relu(x @ W1) @ W2 + x)."""
    x = x_ref[...]                                            # (bm, d_model) f32
    # First MXU matmul: bf16 inputs, f32 accumulation.
    h = jnp.dot(x.astype(jnp.bfloat16), w1_ref[...],
                preferred_element_type=jnp.float32)            # (bm, d_ff) f32
    # ReLU in f32 (no bf16 VALU on v5e), store the temp as bf16.
    h = jnp.maximum(h, 0.0).astype(jnp.bfloat16)               # (bm, d_ff) bf16
    y = jnp.dot(h, w2_ref[...],
                preferred_element_type=jnp.float32)            # (bm, d_model) f32
    # Residual + LayerNorm.  nn.LayerNorm(d_model) is freshly constructed in
    # the PyTorch forward => weight = 1, bias = 0.  Keep everything f32 here.
    z = y + x
    mu = jnp.mean(z, axis=-1, keepdims=True)
    var = jnp.mean((z - mu) ** 2, axis=-1, keepdims=True)
    out_ref[...] = ((z - mu) * jax.lax.rsqrt(var + _LN_EPS)).astype(out_ref.dtype)


def _poswise_ffn_impl(x, w1, w2, *, block_m=1024):
    """x: (B, L, d_model).
    w1: (d_model, d_ff), w2: (d_ff, d_model) -- pre-transposed from PyTorch's
    (out_features, in_features) layout, so the kernel computes x @ W.
    Returns (B, L, d_model) f32."""
    B, L, D = x.shape
    assert D == d_model
    M = B * L
    xf = x.reshape(M, D).astype(jnp.float32)

    # Row-tile size:
    #  * at most block_m,
    #  * aim for >= 2 grid steps on big problems (v7x has 2 TensorCores that
    #    only get work by sharding the "parallel" grid axis),
    #  * never below 512 rows when the problem allows (per-step overhead,
    #    v5e MXU-row fill),
    #  * never above the 8-rounded problem size (sublane multiple).
    bm = min(block_m, _round_up(pl.cdiv(M, 2), 512))
    bm = max(bm, 512)
    bm = min(bm, _round_up(M, 8))

    grid = (pl.cdiv(M, bm),)   # partial final block is masked by Pallas

    out = pl.pallas_call(
        ffn_kernel,
        out_shape=jax.ShapeDtypeStruct((M, D), jnp.float32),
        grid=grid,
        in_specs=[
            pl.BlockSpec((bm, D), lambda i: (i, 0)),       # activations (row tile)
            pl.BlockSpec((D, d_ff), lambda i: (0, 0)),     # W1, VMEM-resident bf16
            pl.BlockSpec((d_ff, D), lambda i: (0, 0)),     # W2, VMEM-resident bf16
        ],
        out_specs=pl.BlockSpec((bm, D), lambda i: (i, 0)),
        compiler_params=pltpu.CompilerParams(
            dimension_semantics=("parallel",)),
    )(xf, w1.astype(jnp.bfloat16), w2.astype(jnp.bfloat16))

    return out.reshape(B, L, D)


# jit so the reshape / dtype-convert wrapper ops fuse with the kernel launch.
poswise_ffn = jax.jit(_poswise_ffn_impl, static_argnames=("block_m",))


def poswise_ffn_reference(x, w1, w2):
    """Pure-JAX f32 reference mirroring the PyTorch module."""
    y = jnp.maximum(x @ w1, 0.0) @ w2
    z = y + x
    mu = jnp.mean(z, axis=-1, keepdims=True)
    var = jnp.mean((z - mu) ** 2, axis=-1, keepdims=True)
    return (z - mu) * jax.lax.rsqrt(var + _LN_EPS)


if __name__ == "__main__":
    B, L = 2, 8
    key = jax.random.PRNGKey(0)
    kx, k1, k2 = jax.random.split(key, 3)

    x = jax.random.normal(kx, (B, L, d_model), dtype=jnp.float32)
    # PyTorch Linear(in, out, bias=False) stores weight as (out, in); we keep W.T.
    w1 = jax.random.normal(k1, (d_model, d_ff), dtype=jnp.float32) * 0.05
    w2 = jax.random.normal(k2, (d_ff, d_model), dtype=jnp.float32) * 0.05

    # Pre-cast weights to bf16 once (the in-kernel operands are bf16 anyway);
    # avoids a redundant f32->bf16 pass every forward call.
    w1_bf16 = w1.astype(jnp.bfloat16)
    w2_bf16 = w2.astype(jnp.bfloat16)

    out = poswise_ffn(x, w1_bf16, w2_bf16)
    jax.block_until_ready(out)

    ref = poswise_ffn_reference(x, w1, w2)
    assert out.shape == (B, L, d_model)
    max_err = float(jnp.max(jnp.abs(out - ref)))
    assert max_err < 5e-2, f"max abs error vs f32 reference: {max_err}"
    print("KERNEL_OK")
</pallas_src>

<mosaic_0001>
module attributes {stable_mosaic.version = 11 : i64} {
  func.func @ffn_kernel(%arg0: i32, %arg1: memref<16x128xf32, #tpu.memory_space<vmem>>, %arg2: memref<128x512xbf16, #tpu.memory_space<vmem>>, %arg3: memref<512x128xbf16, #tpu.memory_space<vmem>>, %arg4: memref<16x128xf32, #tpu.memory_space<vmem>>) attributes {dimension_semantics = [#tpu.dimension_semantics<parallel>], iteration_bounds = array<i64: 1>, scalar_prefetch = 0 : i64, scratch_operands = 0 : i64, tpu.core_type = #tpu.core_type<tc>, window_params = [{transform_indices = @transform_0, window_bounds = array<i64: 16, 128>}, {pipeline_mode = #tpu.pipeline_mode<synchronous>, transform_indices = @transform_1, window_bounds = array<i64: 128, 512>}, {pipeline_mode = #tpu.pipeline_mode<synchronous>, transform_indices = @transform_2, window_bounds = array<i64: 512, 128>}, {transform_indices = @transform_3, window_bounds = array<i64: 16, 128>}]} {
    %c0 = arith.constant 0 : index
    %c0_0 = arith.constant 0 : index
    %0 = vector.load %arg1[%c0, %c0_0] : memref<16x128xf32, #tpu.memory_space<vmem>>, vector<16x128xf32>
    %1 = arith.truncf %0 : vector<16x128xf32> to vector<16x128xbf16>
    %c0_1 = arith.constant 0 : index
    %c0_2 = arith.constant 0 : index
    %2 = vector.load %arg2[%c0_1, %c0_2] : memref<128x512xbf16, #tpu.memory_space<vmem>>, vector<128x512xbf16>
    %cst = arith.constant dense<0.000000e+00> : vector<16x512xf32>
    %3 = tpu.matmul %1, %2, %cst {dimension_numbers = #tpu.dot_dimension_numbers<[1], [0], [0], [1], [0, 0, 1, 1], [], []>} : vector<16x128xbf16>, vector<128x512xbf16>, vector<16x512xf32> -> vector<16x512xf32>
    %cst_3 = arith.constant 0.000000e+00 : f32
    %4 = vector.broadcast %cst_3 : f32 to vector<16x512xf32>
    %5 = arith.maximumf %3, %4 : vector<16x512xf32>
    %6 = arith.truncf %5 : vector<16x512xf32> to vector<16x512xbf16>
    %c0_4 = arith.constant 0 : index
    %c0_5 = arith.constant 0 : index
    %7 = vector.load %arg3[%c0_4, %c0_5] : memref<512x128xbf16, #tpu.memory_space<vmem>>, vector<512x128xbf16>
    %cst_6 = arith.constant dense<0.000000e+00> : vector<16x128xf32>
    %8 = tpu.matmul %6, %7, %cst_6 {dimension_numbers = #tpu.dot_dimension_numbers<[1], [0], [0], [1], [0, 0, 1, 1], [], []>} : vector<16x512xbf16>, vector<512x128xbf16>, vector<16x128xf32> -> vector<16x128xf32>
    %9 = arith.addf %8, %0 : vector<16x128xf32>
    %cst_7 = arith.constant dense<0.000000e+00> : vector<16xf32>
    %10 = vector.multi_reduction <add>, %9, %cst_7 [1] : vector<16x128xf32> to vector<16xf32>
    %11 = vector.shape_cast %10 : vector<16xf32> to vector<16x1xf32>
    %cst_8 = arith.constant 1.280000e+02 : f32
    %12 = vector.broadcast %cst_8 : f32 to vector<16x1xf32>
    %13 = arith.divf %11, %12 : vector<16x1xf32>
    %14 = vector.broadcast %13 : vector<16x1xf32> to vector<16x128xf32>
    %15 = arith.subf %9, %14 : vector<16x128xf32>
    %16 = arith.mulf %15, %15 : vector<16x128xf32>
    %cst_9 = arith.constant dense<0.000000e+00> : vector<16xf32>
    %17 = vector.multi_reduction <add>, %16, %cst_9 [1] : vector<16x128xf32> to vector<16xf32>
    %18 = vector.shape_cast %17 : vector<16xf32> to vector<16x1xf32>
    %cst_10 = arith.constant 1.280000e+02 : f32
    %19 = vector.broadcast %cst_10 : f32 to vector<16x1xf32>
    %20 = arith.divf %18, %19 : vector<16x1xf32>
    %21 = vector.broadcast %13 : vector<16x1xf32> to vector<16x128xf32>
    %22 = arith.subf %9, %21 : vector<16x128xf32>
    %cst_11 = arith.constant 9.99999974E-6 : f32
    %23 = vector.broadcast %cst_11 : f32 to vector<16x1xf32>
    %24 = arith.addf %20, %23 : vector<16x1xf32>
    %25 = math.rsqrt %24 : vector<16x1xf32>
    %26 = vector.broadcast %25 : vector<16x1xf32> to vector<16x128xf32>
    %27 = arith.mulf %22, %26 : vector<16x128xf32>
    %c0_12 = arith.constant 0 : index
    %c0_13 = arith.constant 0 : index
    %28 = vector.load %arg4[%c0_12, %c0_13] : memref<16x128xf32, #tpu.memory_space<vmem>>, vector<16x128xf32>
    tpu.vector_store %arg4[%c0_12, %c0_13], %27 {strides = array<i32>} : memref<16x128xf32, #tpu.memory_space<vmem>>, vector<16x128xf32>,
    return
  }
  func.func @transform_0(%arg0: i32) -> (i32, i32) {
    %c0_i32 = arith.constant 0 : i32
    %c0_i32_0 = arith.constant 0 : i32
    return %arg0, %c0_i32 : i32, i32
  }
  func.func @transform_1(%arg0: i32) -> (i32, i32) {
    %c0_i32 = arith.constant 0 : i32
    %c0_i32_0 = arith.constant 0 : i32
    %c0_i32_1 = arith.constant 0 : i32
    return %c0_i32, %c0_i32_0 : i32, i32
  }
  func.func @transform_2(%arg0: i32) -> (i32, i32) {
    %c0_i32 = arith.constant 0 : i32
    %c0_i32_0 = arith.constant 0 : i32
    %c0_i32_1 = arith.constant 0 : i32
    return %c0_i32, %c0_i32_0 : i32, i32
  }
  func.func @transform_3(%arg0: i32) -> (i32, i32) {
    %c0_i32 = arith.constant 0 : i32
    %c0_i32_0 = arith.constant 0 : i32
    return %arg0, %c0_i32 : i32, i32
  }
}

</mosaic_0001>

<llo_original>
// kernel: _poswise_ffn_impl.1
$region0: #{_poswise_ffn_impl.1}
  #allocation0 [shape = 'u32[]', space=smem, size = 0x4, offset = 0x4, fixed_abs, tag = 'smem constant byte address 0x4 - core index']
  #allocation1 [shape = 'u32[144,128]{1,0:T(1,128)}', space=vmem, size = 0x12000, scoped, tag = 'internal scratch']
  %s0 = inlined_call_operand.hbm [shape: f32[16,128], index: 0, kind: input, shape index: {}]
  %s1 = inlined_call_operand.hbm [shape: bf16[128,512], index: 1, kind: input, shape index: {}]
  %s2 = inlined_call_operand.hbm [shape: bf16[512,128], index: 2, kind: input, shape index: {}]
  %s3 = inlined_call_operand.hbm [shape: f32[16,128], index: 3, kind: output, shape index: {}]
  %s4 = sld [smem:[#allocation0]]
  $region34: #{_poswise_ffn_impl.1} parent=0
    _
  %s6 = ssub.s32 1, %s4
  %s7 = scalar_select 0, %s6, %s4
  $region1: #{_poswise_ffn_impl.1} parent=0
    #allocation2 [shape = 'u8[8192]{0}', space=vmem, size = 0x2000, scoped, tag = 'input window, operand 0, single buffered']
    #allocation3 [shape = 's32[1]{0}', space=sflag, size = 0x4, scoped, tag = 'scoped memory for _poswise_ffn_impl.1']
    #allocation4 [shape = 's32[1]{0}', space=sflag, size = 0x4, scoped, tag = 'scoped memory for _poswise_ffn_impl.1']
    #allocation5 [shape = 'u8[131072]{0}', space=vmem, size = 0x20000, scoped, tag = 'input window, operand 1, single buffered']
    #allocation6 [shape = 's32[1]{0}', space=sflag, size = 0x4, scoped, tag = 'scoped memory for _poswise_ffn_impl.1']
    #allocation7 [shape = 'u8[131072]{0}', space=vmem, size = 0x20000, scoped, tag = 'input window, operand 2, single buffered']
    #allocation8 [shape = 'u8[8192]{0}', space=vmem, size = 0x2000, scoped, tag = 'output window, operand 0, single buffered']
    %8 = vsyncpa [#allocation3], 0
    %9 = vsyncpa [#allocation6], 0
    %10 = vsyncpa [#allocation4], 0
    // Predicated region
    $region2: #{_poswise_ffn_impl.1} parent=1 // pred_check
      _
    $region3: #{_poswise_ffn_impl.1} parent=1 // pred_check_branch
      %12 = sbr.rel (0) target = $region5
    $region4: #{_poswise_ffn_impl.1} parent=1 // pred_region
      %s14 = ssub.s32 256, 256
      %15 = vsyncadd [#allocation3], %s14
      %s16 = sshll.u32 [#allocation2], 4
      %s17 = int_to_ptr.vmem [resolvable:$true] %s16
      %22 = dma.hbm_to_vmem [thread:$0]  %s0, 256, %s17, [#allocation3], 128, 128, 8
    $region5: #{_poswise_ffn_impl.1} parent=1 // pred_fallthru
      _
    // Predicated region
    $region6: #{_poswise_ffn_impl.1} parent=1 // pred_check
      _
    $region7: #{_poswise_ffn_impl.1} parent=1 // pred_check_branch
      %24 = sbr.rel (0) target = $region9
    $region8: #{_poswise_ffn_impl.1} parent=1 // pred_region
      %s26 = ssub.s32 4096, 4096
      %27 = vsyncadd [#allocation6], %s26
      %s28 = sshll.u32 [#allocation5], 4
      %s29 = int_to_ptr.vmem [resolvable:$true] %s28
      %34 = dma.hbm_to_vmem [thread:$0]  %s1, 4096, %s29, [#allocation6], 256, 256, 16
    $region9: #{_poswise_ffn_impl.1} parent=1 // pred_fallthru
      _
    // Predicated region
    $region10: #{_poswise_ffn_impl.1} parent=1 // pred_check
      _
    $region11: #{_poswise_ffn_impl.1} parent=1 // pred_check_branch
      %36 = sbr.rel (0) target = $region13
    $region12: #{_poswise_ffn_impl.1} parent=1 // pred_region
      %s38 = ssub.s32 4096, 4096
      %39 = vsyncadd [#allocation6], %s38
      %s40 = sshll.u32 [#allocation7], 4
      %s41 = int_to_ptr.vmem [resolvable:$true] %s40
      %46 = dma.hbm_to_vmem [thread:$0]  %s2, 4096, %s41, [#allocation6], 64, 64, 4
    $region13: #{_poswise_ffn_impl.1} parent=1 // pred_fallthru
      _
    // Predicated region
    $region14: #{_poswise_ffn_impl.1} parent=1 // pred_check
      _
    $region15: #{_poswise_ffn_impl.1} parent=1 // pred_check_branch
      %48 = sbr.rel (0) target = $region17
    $region16: #{_poswise_ffn_impl.1} parent=1 // pred_region
      %49 = dma.done [#allocation3], 256
    $region17: #{_poswise_ffn_impl.1} parent=1 // pred_fallthru
      _
    // Predicated region
    $region18: #{_poswise_ffn_impl.1} parent=1 // pred_check
      _
    $region19: #{_poswise_ffn_impl.1} parent=1 // pred_check_branch
      %51 = sbr.rel (0) target = $region21
    $region20: #{_poswise_ffn_impl.1} parent=1 // pred_region
      %52 = dma.done [#allocation6], 4096
    $region21: #{_poswise_ffn_impl.1} parent=1 // pred_fallthru
      _
    // Predicated region
    $region22: #{_poswise_ffn_impl.1} parent=1 // pred_check
      _
    $region23: #{_poswise_ffn_impl.1} parent=1 // pred_check_branch
      %54 = sbr.rel (0) target = $region25
    $region24: #{_poswise_ffn_impl.1} parent=1 // pred_region
      %55 = dma.done [#allocation6], 4096
    $region25: #{_poswise_ffn_impl.1} parent=1 // pred_fallthru
      _
    %v57 = vld [vmem:[#allocation2] sm:$0xff]
    %v58 = vld [vmem:[#allocation2 + $0x8] sm:$0xff]
    %v59 = vpack.c.bf16 %v58, %v57
    %v60 = vld [vmem:[#allocation5] sm:$0xff]
    %v61 = vld [vmem:[#allocation5 + $0x8] sm:$0xff]
    %v62 = vld [vmem:[#allocation5 + $0x10] sm:$0xff]
    %v63 = vld [vmem:[#allocation5 + $0x18] sm:$0xff]
    %v64 = vld [vmem:[#allocation5 + $0x20] sm:$0xff]
    %v65 = vld [vmem:[#allocation5 + $0x28] sm:$0xff]
    %v66 = vld [vmem:[#allocation5 + $0x30] sm:$0xff]
    %v67 = vld [vmem:[#allocation5 + $0x38] sm:$0xff]
    %v68 = vld [vmem:[#allocation5 + $0x40] sm:$0xff]
    %v69 = vld [vmem:[#allocation5 + $0x48] sm:$0xff]
    %v70 = vld [vmem:[#allocation5 + $0x50] sm:$0xff]
    %v71 = vld [vmem:[#allocation5 + $0x58] sm:$0xff]
    %v72 = vld [vmem:[#allocation5 + $0x60] sm:$0xff]
    %v73 = vld [vmem:[#allocation5 + $0x68] sm:$0xff]
    %v74 = vld [vmem:[#allocation5 + $0x70] sm:$0xff]
    %v75 = vld [vmem:[#allocation5 + $0x78] sm:$0xff]
    %v76 = vld [vmem:[#allocation5 + $0x80] sm:$0xff]
    %v77 = vld [vmem:[#allocation5 + $0x88] sm:$0xff]
    %v78 = vld [vmem:[#allocation5 + $0x90] sm:$0xff]
    %v79 = vld [vmem:[#allocation5 + $0x98] sm:$0xff]
    %v80 = vld [vmem:[#allocation5 + $0xa0] sm:$0xff]
    %v81 = vld [vmem:[#allocation5 + $0xa8] sm:$0xff]
    %v82 = vld [vmem:[#allocation5 + $0xb0] sm:$0xff]
    %v83 = vld [vmem:[#allocation5 + $0xb8] sm:$0xff]
    %v84 = vld [vmem:[#allocation5 + $0xc0] sm:$0xff]
    %v85 = vld [vmem:[#allocation5 + $0xc8] sm:$0xff]
    %v86 = vld [vmem:[#allocation5 + $0xd0] sm:$0xff]
    %v87 = vld [vmem:[#allocation5 + $0xd8] sm:$0xff]
    %v88 = vld [vmem:[#allocation5 + $0xe0] sm:$0xff]
    %v89 = vld [vmem:[#allocation5 + $0xe8] sm:$0xff]
    %v90 = vld [vmem:[#allocation5 + $0xf0] sm:$0xff]
    %v91 = vld [vmem:[#allocation5 + $0xf8] sm:$0xff]
    %v124 = vunpack.c.l.b16 %v60
    %v125 = vunpack.c.h.b16 %v60
    %v126 = vunpack.c.l.b16 %v61
    %v127 = vunpack.c.h.b16 %v61
    %v128 = vunpack.c.l.b16 %v62
    %v129 = vunpack.c.h.b16 %v62
    %v130 = vunpack.c.l.b16 %v63
    %v131 = vunpack.c.h.b16 %v63
    %v132 = vunpack.c.l.b16 %v64
    %v133 = vunpack.c.h.b16 %v64
    %v134 = vunpack.c.l.b16 %v65
    %v135 = vunpack.c.h.b16 %v65
    %v136 = vunpack.c.l.b16 %v66
    %v137 = vunpack.c.h.b16 %v66
    %v138 = vunpack.c.l.b16 %v67
    %v139 = vunpack.c.h.b16 %v67
    %v140 = vunpack.c.l.b16 %v68
    %v141 = vunpack.c.h.b16 %v68
    %v142 = vunpack.c.l.b16 %v69
    %v143 = vunpack.c.h.b16 %v69
    %v144 = vunpack.c.l.b16 %v70
    %v145 = vunpack.c.h.b16 %v70
    %v146 = vunpack.c.l.b16 %v71
    %v147 = vunpack.c.h.b16 %v71
    %v148 = vunpack.c.l.b16 %v72
    %v149 = vunpack.c.h.b16 %v72
    %v150 = vunpack.c.l.b16 %v73
    %v151 = vunpack.c.h.b16 %v73
    %v152 = vunpack.c.l.b16 %v74
    %v153 = vunpack.c.h.b16 %v74
    %v154 = vunpack.c.l.b16 %v75
    %v155 = vunpack.c.h.b16 %v75
    %v156 = vunpack.c.l.b16 %v76
    %v157 = vunpack.c.h.b16 %v76
    %v158 = vunpack.c.l.b16 %v77
    %v159 = vunpack.c.h.b16 %v77
    %v160 = vunpack.c.l.b16 %v78
    %v161 = vunpack.c.h.b16 %v78
    %v162 = vunpack.c.l.b16 %v79
    %v163 = vunpack.c.h.b16 %v79
    %v164 = vunpack.c.l.b16 %v80
    %v165 = vunpack.c.h.b16 %v80
    %v166 = vunpack.c.l.b16 %v81
    %v167 = vunpack.c.h.b16 %v81
    %v168 = vunpack.c.l.b16 %v82
    %v169 = vunpack.c.h.b16 %v82
    %v170 = vunpack.c.l.b16 %v83
    %v171 = vunpack.c.h.b16 %v83
    %v172 = vunpack.c.l.b16 %v84
    %v173 = vunpack.c.h.b16 %v84
    %v174 = vunpack.c.l.b16 %v85
    %v175 = vunpack.c.h.b16 %v85
    %v176 = vunpack.c.l.b16 %v86
    %v177 = vunpack.c.h.b16 %v86
    %v178 = vunpack.c.l.b16 %v87
    %v179 = vunpack.c.h.b16 %v87
    %v180 = vunpack.c.l.b16 %v88
    %v181 = vunpack.c.h.b16 %v88
    %v182 = vunpack.c.l.b16 %v89
    %v183 = vunpack.c.h.b16 %v89
    %v184 = vunpack.c.l.b16 %v90
    %v185 = vunpack.c.h.b16 %v90
    %v186 = vunpack.c.l.b16 %v91
    %v187 = vunpack.c.h.b16 %v91
    %v188 = vpack.c.b16 %v128, %v124
    %v189 = vpack.c.b16 %v129, %v125
    %v190 = vpack.c.b16 %v130, %v126
    %v191 = vpack.c.b16 %v131, %v127
    %v192 = vpack.c.b16 %v136, %v132
    %v193 = vpack.c.b16 %v137, %v133
    %v194 = vpack.c.b16 %v138, %v134
    %v195 = vpack.c.b16 %v139, %v135
    %v196 = vpack.c.b16 %v144, %v140
    %v197 = vpack.c.b16 %v145, %v141
    %v198 = vpack.c.b16 %v146, %v142
    %v199 = vpack.c.b16 %v147, %v143
    %v200 = vpack.c.b16 %v152, %v148
    %v201 = vpack.c.b16 %v153, %v149
    %v202 = vpack.c.b16 %v154, %v150
    %v203 = vpack.c.b16 %v155, %v151
    %v204 = vpack.c.b16 %v160, %v156
    %v205 = vpack.c.b16 %v161, %v157
    %v206 = vpack.c.b16 %v162, %v158
    %v207 = vpack.c.b16 %v163, %v159
    %v208 = vpack.c.b16 %v168, %v164
    %v209 = vpack.c.b16 %v169, %v165
    %v210 = vpack.c.b16 %v170, %v166
    %v211 = vpack.c.b16 %v171, %v167
    %v212 = vpack.c.b16 %v176, %v172
    %v213 = vpack.c.b16 %v177, %v173
    %v214 = vpack.c.b16 %v178, %v174
    %v215 = vpack.c.b16 %v179, %v175
    %v216 = vpack.c.b16 %v184, %v180
    %v217 = vpack.c.b16 %v185, %v181
    %v218 = vpack.c.b16 %v186, %v182
    %v219 = vpack.c.b16 %v187, %v183
    %252 = vmatprep.subr.bf16.mxu0 %v217
    %253 = vmatpush1.bf16.msra.mxu0 %v216
    %254 = vmatprep.subr.bf16.mxu0 %v213
    %255 = vmatpush1.bf16.msra.mxu0 %v212
    %256 = vmatprep.subr.bf16.mxu0 %v209
    %257 = vmatpush1.bf16.msra.mxu0 %v208
    %258 = vmatprep.subr.bf16.mxu0 %v205
    %259 = vmatpush1.bf16.msra.mxu0 %v204
    %260 = vmatprep.subr.bf16.mxu0 %v201
    %261 = vmatpush1.bf16.msra.mxu0 %v200
    %262 = vmatprep.subr.bf16.mxu0 %v197
    %263 = vmatpush1.bf16.msra.mxu0 %v196
    %264 = vmatprep.subr.bf16.mxu0 %v193
    %265 = vmatpush1.bf16.msra.mxu0 %v192
    %266 = vmatprep.subr.bf16.mxu0 %v189
    %267 = vmatpush1.bf16.msra.mxu0 %v188
    %268 = vmatprep.subr.bf16.mxu0 0
    %269 = vmatpush2.bf16.msra.mxu0 0
    %270 = vmatprep.subr.bf16.mxu0 0
    %271 = vmatpush2.bf16.msra.mxu0 0
    %272 = vmatprep.subr.bf16.mxu0 0
    %273 = vmatpush2.bf16.msra.mxu0 0
    %274 = vmatprep.subr.bf16.mxu0 0
    %275 = vmatpush2.bf16.msra.mxu0 0
    %276 = vmatprep.subr.bf16.mxu0 0
    %277 = vmatpush2.bf16.msra.mxu0 0
    %278 = vmatprep.subr.bf16.mxu0 0
    %279 = vmatpush2.bf16.msra.mxu0 0
    %280 = vmatprep.subr.bf16.mxu0 0
    %281 = vmatpush2.bf16.msra.mxu0 0
    %282 = vmatprep.subr.bf16.mxu0 0
    %283 = vmatpush2.bf16.msra.mxu0 0
    %284 = vmatprep.mubr.bf16.mxu0 0
    %285 = vmatmul.mubr.bf16.gmra.mxu0 %v59
    %v286 = vpop.f32.mrf.mxu0
    %v287 = vadd.f32 0.0, %v286
    %v288 = vpop.f32.mrf.mxu0
    %v289 = vadd.f32 0.0, %v288
    %v290 = vpop.f32.mrf.mxu0
    %v291 = vadd.f32 0.0, %v290
    %v292 = vpop.f32.mrf.mxu0
    %v293 = vadd.f32 0.0, %v292
    %294 = vdwg.mxu0
    %295 = vmatprep.subr.bf16.mxu0 %v219
    %296 = vmatpush1.bf16.msra.mxu0 %v218
    %297 = vmatprep.subr.bf16.mxu0 %v215
    %298 = vmatpush1.bf16.msra.mxu0 %v214
    %299 = vmatprep.subr.bf16.mxu0 %v211
    %300 = vmatpush1.bf16.msra.mxu0 %v210
    %301 = vmatprep.subr.bf16.mxu0 %v207
    %302 = vmatpush1.bf16.msra.mxu0 %v206
    %303 = vmatprep.subr.bf16.mxu0 %v203
    %304 = vmatpush1.bf16.msra.mxu0 %v202
    %305 = vmatprep.subr.bf16.mxu0 %v199
    %306 = vmatpush1.bf16.msra.mxu0 %v198
    %307 = vmatprep.subr.bf16.mxu0 %v195
    %308 = vmatpush1.bf16.msra.mxu0 %v194
    %309 = vmatprep.subr.bf16.mxu0 %v191
    %310 = vmatpush1.bf16.msra.mxu0 %v190
    %311 = vmatprep.subr.bf16.mxu0 0
    %312 = vmatpush2.bf16.msra.mxu0 0
    %313 = vmatprep.subr.bf16.mxu0 0
    %314 = vmatpush2.bf16.msra.mxu0 0
    %315 = vmatprep.subr.bf16.mxu0 0
    %316 = vmatpush2.bf16.msra.mxu0 0
    %317 = vmatprep.subr.bf16.mxu0 0
    %318 = vmatpush2.bf16.msra.mxu0 0
    %319 = vmatprep.subr.bf16.mxu0 0
    %320 = vmatpush2.bf16.msra.mxu0 0
    %321 = vmatprep.subr.bf16.mxu0 0
    %322 = vmatpush2.bf16.msra.mxu0 0
    %323 = vmatprep.subr.bf16.mxu0 0
    %324 = vmatpush2.bf16.msra.mxu0 0
    %325 = vmatprep.subr.bf16.mxu0 0
    %326 = vmatpush2.bf16.msra.mxu0 0
    %327 = vmatprep.mubr.bf16.mxu0 0
    %328 = vmatmul.mubr.bf16.gmra.mxu0 %v59
    %v329 = vpop.f32.mrf.mxu0
    %v330 = vadd.f32 0.0, %v329
    %v331 = vpop.f32.mrf.mxu0
    %v332 = vadd.f32 0.0, %v331
    %v333 = vpop.f32.mrf.mxu0
    %v334 = vadd.f32 0.0, %v333
    %v335 = vpop.f32.mrf.mxu0
    %v336 = vadd.f32 0.0, %v335
    %337 = vdwg.mxu0
    %v338 = vmax.f32 %v287, 0.0
    %v339 = vmax.f32 %v289, 0.0
    %v340 = vmax.f32 %v330, 0.0
    %v341 = vmax.f32 %v332, 0.0
    %v342 = vmax.f32 %v291, 0.0
    %v343 = vmax.f32 %v293, 0.0
    %v344 = vmax.f32 %v334, 0.0
    %v345 = vmax.f32 %v336, 0.0
    %v346 = vpack.c.bf16 %v342, %v338
    %v347 = vpack.c.bf16 %v343, %v339
    %v348 = vpack.c.bf16 %v344, %v340
    %v349 = vpack.c.bf16 %v345, %v341
    %v350 = vld [vmem:[#allocation7] sm:$0xf]
    %v351 = vld [vmem:[#allocation7 + $0x4] sm:$0xf]
    %v352 = vld [vmem:[#allocation7 + $0x8] sm:$0xf]
    %v353 = vld [vmem:[#allocation7 + $0xc] sm:$0xf]
    %v354 = vld [vmem:[#allocation7 + $0x10] sm:$0xf]
    %v355 = vld [vmem:[#allocation7 + $0x14] sm:$0xf]
    %v356 = vld [vmem:[#allocation7 + $0x18] sm:$0xf]
    %v357 = vld [vmem:[#allocation7 + $0x1c] sm:$0xf]
    %v358 = vld [vmem:[#allocation7 + $0x20] sm:$0xf]
    %v359 = vld [vmem:[#allocation7 + $0x24] sm:$0xf]
    %v360 = vld [vmem:[#allocation7 + $0x28] sm:$0xf]
    %v361 = vld [vmem:[#allocation7 + $0x2c] sm:$0xf]
    %v362 = vld [vmem:[#allocation7 + $0x30] sm:$0xf]
    %v363 = vld [vmem:[#allocation7 + $0x34] sm:$0xf]
    %v364 = vld [vmem:[#allocation7 + $0x38] sm:$0xf]
    %v365 = vld [vmem:[#allocation7 + $0x3c] sm:$0xf]
    %v366 = vld [vmem:[#allocation7 + $0x40] sm:$0xf]
    %v367 = vld [vmem:[#allocation7 + $0x44] sm:$0xf]
    %v368 = vld [vmem:[#allocation7 + $0x48] sm:$0xf]
    %v369 = vld [vmem:[#allocation7 + $0x4c] sm:$0xf]
    %v370 = vld [vmem:[#allocation7 + $0x50] sm:$0xf]
    %v371 = vld [vmem:[#allocation7 + $0x54] sm:$0xf]
    %v372 = vld [vmem:[#allocation7 + $0x58] sm:$0xf]
    %v373 = vld [vmem:[#allocation7 + $0x5c] sm:$0xf]
    %v374 = vld [vmem:[#allocation7 + $0x60] sm:$0xf]
    %v375 = vld [vmem:[#allocation7 + $0x64] sm:$0xf]
    %v376 = vld [vmem:[#allocation7 + $0x68] sm:$0xf]
    %v377 = vld [vmem:[#allocation7 + $0x6c] sm:$0xf]
    %v378 = vld [vmem:[#allocation7 + $0x70] sm:$0xf]
    %v379 = vld [vmem:[#allocation7 + $0x74] sm:$0xf]
    %v380 = vld [vmem:[#allocation7 + $0x78] sm:$0xf]
    %v381 = vld [vmem:[#allocation7 + $0x7c] sm:$0xf]
    %v382 = vld [vmem:[#allocation7 + $0x80] sm:$0xf]
    %v383 = vld [vmem:[#allocation7 + $0x84] sm:$0xf]
    %v384 = vld [vmem:[#allocation7 + $0x88] sm:$0xf]
    %v385 = vld [vmem:[#allocation7 + $0x8c] sm:$0xf]
    %v386 = vld [vmem:[#allocation7 + $0x90] sm:$0xf]
    %v387 = vld [vmem:[#allocation7 + $0x94] sm:$0xf]
    %v388 = vld [vmem:[#allocation7 + $0x98] sm:$0xf]
    %v389 = vld [vmem:[#allocation7 + $0x9c] sm:$0xf]
    %v390 = vld [vmem:[#allocation7 + $0xa0] sm:$0xf]
    %v391 = vld [vmem:[#allocation7 + $0xa4] sm:$0xf]
    %v392 = vld [vmem:[#allocation7 + $0xa8] sm:$0xf]
    %v393 = vld [vmem:[#allocation7 + $0xac] sm:$0xf]
    %v394 = vld [vmem:[#allocation7 + $0xb0] sm:$0xf]
    %v395 = vld [vmem:[#allocation7 + $0xb4] sm:$0xf]
    %v396 = vld [vmem:[#allocation7 + $0xb8] sm:$0xf]
    %v397 = vld [vmem:[#allocation7 + $0xbc] sm:$0xf]
    %v398 = vld [vmem:[#allocation7 + $0xc0] sm:$0xf]
    %v399 = vld [vmem:[#allocation7 + $0xc4] sm:$0xf]
    %v400 = vld [vmem:[#allocation7 + $0xc8] sm:$0xf]
    %v401 = vld [vmem:[#allocation7 + $0xcc] sm:$0xf]
    %v402 = vld [vmem:[#allocation7 + $0xd0] sm:$0xf]
    %v403 = vld [vmem:[#allocation7 + $0xd4] sm:$0xf]
    %v404 = vld [vmem:[#allocation7 + $0xd8] sm:$0xf]
    %v405 = vld [vmem:[#allocation7 + $0xdc] sm:$0xf]
    %v406 = vld [vmem:[#allocation7 + $0xe0] sm:$0xf]
    %v407 = vld [vmem:[#allocation7 + $0xe4] sm:$0xf]
    %v408 = vld [vmem:[#allocation7 + $0xe8] sm:$0xf]
    %v409 = vld [vmem:[#allocation7 + $0xec] sm:$0xf]
    %v410 = vld [vmem:[#allocation7 + $0xf0] sm:$0xf]
    %v411 = vld [vmem:[#allocation7 + $0xf4] sm:$0xf]
    %v412 = vld [vmem:[#allocation7 + $0xf8] sm:$0xf]
    %v413 = vld [vmem:[#allocation7 + $0xfc] sm:$0xf]
    %v478 = vunpack.c.l.b16 %v350
    %v479 = vunpack.c.l.b16 %v351
    %v480 = vunpack.c.l.b16 %v352
    %v481 = vunpack.c.l.b16 %v353
    %v482 = vunpack.c.l.b16 %v354
    %v483 = vunpack.c.l.b16 %v355
    %v484 = vunpack.c.l.b16 %v356
    %v485 = vunpack.c.l.b16 %v357
    %v486 = vunpack.c.l.b16 %v358
    %v487 = vunpack.c.l.b16 %v359
    %v488 = vunpack.c.l.b16 %v360
    %v489 = vunpack.c.l.b16 %v361
    %v490 = vunpack.c.l.b16 %v362
    %v491 = vunpack.c.l.b16 %v363
    %v492 = vunpack.c.l.b16 %v364
    %v493 = vunpack.c.l.b16 %v365
    %v494 = vunpack.c.l.b16 %v366
    %v495 = vunpack.c.l.b16 %v367
    %v496 = vunpack.c.l.b16 %v368
    %v497 = vunpack.c.l.b16 %v369
    %v498 = vunpack.c.l.b16 %v370
    %v499 = vunpack.c.l.b16 %v371
    %v500 = vunpack.c.l.b16 %v372
    %v501 = vunpack.c.l.b16 %v373
    %v502 = vunpack.c.l.b16 %v374
    %v503 = vunpack.c.l.b16 %v375
    %v504 = vunpack.c.l.b16 %v376
    %v505 = vunpack.c.l.b16 %v377
    %v506 = vunpack.c.l.b16 %v378
    %v507 = vunpack.c.l.b16 %v379
    %v508 = vunpack.c.l.b16 %v380
    %v509 = vunpack.c.l.b16 %v381
    %v510 = vunpack.c.l.b16 %v382
    %v511 = vunpack.c.l.b16 %v383
    %v512 = vunpack.c.l.b16 %v384
    %v513 = vunpack.c.l.b16 %v385
    %v514 = vunpack.c.l.b16 %v386
    %v515 = vunpack.c.l.b16 %v387
    %v516 = vunpack.c.l.b16 %v388
    %v517 = vunpack.c.l.b16 %v389
    %v518 = vunpack.c.l.b16 %v390
    %v519 = vunpack.c.l.b16 %v391
    %v520 = vunpack.c.l.b16 %v392
    %v521 = vunpack.c.l.b16 %v393
    %v522 = vunpack.c.l.b16 %v394
    %v523 = vunpack.c.l.b16 %v395
    %v524 = vunpack.c.l.b16 %v396
    %v525 = vunpack.c.l.b16 %v397
    %v526 = vunpack.c.l.b16 %v398
    %v527 = vunpack.c.l.b16 %v399
    %v528 = vunpack.c.l.b16 %v400
    %v529 = vunpack.c.l.b16 %v401
    %v530 = vunpack.c.l.b16 %v402
    %v531 = vunpack.c.l.b16 %v403
    %v532 = vunpack.c.l.b16 %v404
    %v533 = vunpack.c.l.b16 %v405
    %v534 = vunpack.c.l.b16 %v406
    %v535 = vunpack.c.l.b16 %v407
    %v536 = vunpack.c.l.b16 %v408
    %v537 = vunpack.c.l.b16 %v409
    %v538 = vunpack.c.l.b16 %v410
    %v539 = vunpack.c.l.b16 %v411
    %v540 = vunpack.c.l.b16 %v412
    %v541 = vunpack.c.l.b16 %v413
    %v542 = vpack.c.b16 %v479, %v478
    %v543 = vpack.c.b16 %v481, %v480
    %v544 = vpack.c.b16 %v483, %v482
    %v545 = vpack.c.b16 %v485, %v484
    %v546 = vpack.c.b16 %v487, %v486
    %v547 = vpack.c.b16 %v489, %v488
    %v548 = vpack.c.b16 %v491, %v490
    %v549 = vpack.c.b16 %v493, %v492
    %v550 = vpack.c.b16 %v495, %v494
    %v551 = vpack.c.b16 %v497, %v496
    %v552 = vpack.c.b16 %v499, %v498
    %v553 = vpack.c.b16 %v501, %v500
    %v554 = vpack.c.b16 %v503, %v502
    %v555 = vpack.c.b16 %v505, %v504
    %v556 = vpack.c.b16 %v507, %v506
    %v557 = vpack.c.b16 %v509, %v508
    %v558 = vpack.c.b16 %v511, %v510
    %v559 = vpack.c.b16 %v513, %v512
    %v560 = vpack.c.b16 %v515, %v514
    %v561 = vpack.c.b16 %v517, %v516
    %v562 = vpack.c.b16 %v519, %v518
    %v563 = vpack.c.b16 %v521, %v520
    %v564 = vpack.c.b16 %v523, %v522
    %v565 = vpack.c.b16 %v525, %v524
    %v566 = vpack.c.b16 %v527, %v526
    %v567 = vpack.c.b16 %v529, %v528
    %v568 = vpack.c.b16 %v531, %v530
    %v569 = vpack.c.b16 %v533, %v532
    %v570 = vpack.c.b16 %v535, %v534
    %v571 = vpack.c.b16 %v537, %v536
    %v572 = vpack.c.b16 %v539, %v538
    %v573 = vpack.c.b16 %v541, %v540
    %606 = vmatprep.subr.bf16.mxu0 0
    %607 = vmatpush1.bf16.msra.mxu0 %v549
    %608 = vmatprep.subr.bf16.mxu0 0
    %609 = vmatpush1.bf16.msra.mxu0 %v548
    %610 = vmatprep.subr.bf16.mxu0 0
    %611 = vmatpush1.bf16.msra.mxu0 %v547
    %612 = vmatprep.subr.bf16.mxu0 0
    %613 = vmatpush1.bf16.msra.mxu0 %v546
    %614 = vmatprep.subr.bf16.mxu0 0
    %615 = vmatpush1.bf16.msra.mxu0 %v545
    %616 = vmatprep.subr.bf16.mxu0 0
    %617 = vmatpush1.bf16.msra.mxu0 %v544
    %618 = vmatprep.subr.bf16.mxu0 0
    %619 = vmatpush1.bf16.msra.mxu0 %v543
    %620 = vmatprep.subr.bf16.mxu0 0
    %621 = vmatpush1.bf16.msra.mxu0 %v542
    %622 = vmatprep.subr.bf16.mxu0 0
    %623 = vmatpush2.bf16.msra.mxu0 %v557
    %624 = vmatprep.subr.bf16.mxu0 0
    %625 = vmatpush2.bf16.msra.mxu0 %v556
    %626 = vmatprep.subr.bf16.mxu0 0
    %627 = vmatpush2.bf16.msra.mxu0 %v555
    %628 = vmatprep.subr.bf16.mxu0 0
    %629 = vmatpush2.bf16.msra.mxu0 %v554
    %630 = vmatprep.subr.bf16.mxu0 0
    %631 = vmatpush2.bf16.msra.mxu0 %v553
    %632 = vmatprep.subr.bf16.mxu0 0
    %633 = vmatpush2.bf16.msra.mxu0 %v552
    %634 = vmatprep.subr.bf16.mxu0 0
    %635 = vmatpush2.bf16.msra.mxu0 %v551
    %636 = vmatprep.subr.bf16.mxu0 0
    %637 = vmatpush2.bf16.msra.mxu0 %v550
    %638 = vmatprep.mubr.bf16.mxu0 %v347
    %639 = vmatmul.mubr.bf16.gmra.mxu0 %v346
    %v640 = vpop.f32.mrf.mxu0
    %v641 = vadd.f32 %v57, %v640
    %v642 = vpop.f32.mrf.mxu0
    %v643 = vpop.f32.mrf.mxu0
    %v644 = vadd.f32 %v58, %v643
    %v645 = vpop.f32.mrf.mxu0
    %646 = vdwg.mxu0
    %647 = vmatprep.subr.bf16.mxu0 0
    %648 = vmatpush1.bf16.msra.mxu0 %v565
    %649 = vmatprep.subr.bf16.mxu0 0
    %650 = vmatpush1.bf16.msra.mxu0 %v564
    %651 = vmatprep.subr.bf16.mxu0 0
    %652 = vmatpush1.bf16.msra.mxu0 %v563
    %653 = vmatprep.subr.bf16.mxu0 0
    %654 = vmatpush1.bf16.msra.mxu0 %v562
    %655 = vmatprep.subr.bf16.mxu0 0
    %656 = vmatpush1.bf16.msra.mxu0 %v561
    %657 = vmatprep.subr.bf16.mxu0 0
    %658 = vmatpush1.bf16.msra.mxu0 %v560
    %659 = vmatprep.subr.bf16.mxu0 0
    %660 = vmatpush1.bf16.msra.mxu0 %v559
    %661 = vmatprep.subr.bf16.mxu0 0
    %662 = vmatpush1.bf16.msra.mxu0 %v558
    %663 = vmatprep.subr.bf16.mxu0 0
    %664 = vmatpush2.bf16.msra.mxu0 %v573
    %665 = vmatprep.subr.bf16.mxu0 0
    %666 = vmatpush2.bf16.msra.mxu0 %v572
    %667 = vmatprep.subr.bf16.mxu0 0
    %668 = vmatpush2.bf16.msra.mxu0 %v571
    %669 = vmatprep.subr.bf16.mxu0 0
    %670 = vmatpush2.bf16.msra.mxu0 %v570
    %671 = vmatprep.subr.bf16.mxu0 0
    %672 = vmatpush2.bf16.msra.mxu0 %v569
    %673 = vmatprep.subr.bf16.mxu0 0
    %674 = vmatpush2.bf16.msra.mxu0 %v568
    %675 = vmatprep.subr.bf16.mxu0 0
    %676 = vmatpush2.bf16.msra.mxu0 %v567
    %677 = vmatprep.subr.bf16.mxu0 0
    %678 = vmatpush2.bf16.msra.mxu0 %v566
    %679 = vmatprep.mubr.bf16.mxu0 %v349
    %680 = vmatmul.mubr.bf16.gmra.mxu0 %v348
    %v681 = vpop.f32.mrf.mxu0
    %v682 = vadd.f32 %v641, %v681
    %v683 = vpop.f32.mrf.mxu0
    %v684 = vpop.f32.mrf.mxu0
    %v685 = vadd.f32 %v644, %v684
    %v686 = vpop.f32.mrf.mxu0
    %687 = vdwg.mxu0
    %688 = vadd.xlane.f32.xlu0 %v682
    %v689 = vpop.xlane.xlu0 %688
    %690 = vadd.xlane.f32.xlu0 %v685
    %v691 = vpop.xlane.xlu0 %690
    %v692 = vrcp.pop 128.0
    %v693 = vmul.f32 %v689, %v692
    %v694 = vmul.f32 %v691, %v692
    %v695 = vsub.f32 %v682, %v693
    %v696 = vsub.f32 %v685, %v694
    %v697 = vmul.f32 %v695, %v695
    %v698 = vmul.f32 %v696, %v696
    %699 = vadd.xlane.f32.xlu0 %v697
    %v700 = vpop.xlane.xlu0 %699
    %701 = vadd.xlane.f32.xlu0 %v698
    %v702 = vpop.xlane.xlu0 %701
    %v703 = vmul.f32 %v700, %v692
    %v704 = vmul.f32 %v702, %v692
    %v705 = vadd.f32 %v703, 1e-05
    %v706 = vadd.f32 %v704, 1e-05
    %v707 = vrsqrt.pop %v705
    %v708 = vrsqrt.pop %v706
    %v709 = vmul.f32 %v695, %v707
    %v710 = vmul.f32 %v696, %v708
    %711 = vst [vmem:[#allocation8] sm:$0xff] %v709
    %712 = vst [vmem:[#allocation8 + $0x8] sm:$0xff] %v710
    // Predicated region
    $region26: #{_poswise_ffn_impl.1} parent=1 // pred_check
      _
    $region27: #{_poswise_ffn_impl.1} parent=1 // pred_check_branch
      %714 = sbr.rel (0) target = $region29
    $region28: #{_poswise_ffn_impl.1} parent=1 // pred_region
      %s716 = ssub.s32 256, 256
      %717 = vsyncadd [#allocation4], %s716
      %s718 = sshll.u32 [#allocation8], 4
      %s719 = int_to_ptr.vmem [resolvable:$true] %s718
      %724 = dma.vmem_to_hbm [thread:$0]  %s719, 256, %s3, [#allocation4], 128, 128, 8
    $region29: #{_poswise_ffn_impl.1} parent=1 // pred_fallthru
      _
    // Predicated region
    $region30: #{_poswise_ffn_impl.1} parent=1 // pred_check
      _
    $region31: #{_poswise_ffn_impl.1} parent=1 // pred_check_branch
      %726 = sbr.rel (0) target = $region33
    $region32: #{_poswise_ffn_impl.1} parent=1 // pred_region
      %727 = dma.done [#allocation4], 256
    $region33: #{_poswise_ffn_impl.1} parent=1 // pred_fallthru
      _
    %728 = vsyncpa [#allocation3], 1
    %729 = vsyncpa [#allocation6], 1
    %730 = vsyncpa [#allocation4], 1

</llo_original>
